<compile_context>
chip_gen: v7x
topology: tpu7x:2x2x1
jax: 0.10.0
libtpu: 0.0.40
codegen_flags: <defaults>
</compile_context>

<pallas_src>
import functools

import jax
import jax.numpy as jnp
from jax.experimental import pallas as pl
from jax.experimental.pallas import tpu as pltpu


def _round_up(n, m):
    return ((n + m - 1) // m) * m


def _rnn_kernel(x_ref, wih_ref, whh_ref, b_ref, h0_ref, out_ref, hn_ref,
                h_scratch, xw_scratch):
    """One grid step = one (batch_tile, time_chunk).

    x_ref:   (TB, BT, I)   time-major input chunk
    wih_ref: (I,  Hp)      W_ih^T  (f32, padded)
    whh_ref: (Hp, Hp)      W_hh^T  (f32, padded)
    b_ref:   (BT, Hp)      bias pre-broadcast over batch (f32)
    h0_ref:  (BT, Hp)      initial hidden state (f32)
    out_ref: (TB, BT, Hp)  per-chunk output block
    hn_ref:  (BT, Hp)      final hidden state
    h_scratch:  (BT, Hp)      f32 carry across time chunks
    xw_scratch: (TB, BT, Hp)  f32 chunk-wide input projection
    """
    c = pl.program_id(1)  # time-chunk index (trailing, "arbitrary")

    @pl.when(c == 0)
    def _():
        h_scratch[...] = h0_ref[...]

    TB, BT, I = x_ref.shape
    Hp = whh_ref.shape[1]

    # Chunk-wide input projection: one MXU matmul over TB*BT rows, plus the
    # pre-broadcast bias. Hoists the x-side work out of the serial loop.
    x_flat = x_ref[...].reshape(TB * BT, I)
    xw = jnp.dot(x_flat, wih_ref[...], preferred_element_type=jnp.float32)
    xw_scratch[...] = xw.reshape(TB, BT, Hp) + b_ref[...]

    whh = whh_ref[...]  # f32 already (cast hoisted to the wrapper)

    def step(t, h):
        pre = xw_scratch[t] + jnp.dot(h, whh, preferred_element_type=jnp.float32)
        h_new = jnp.tanh(pre)
        out_ref[t] = h_new.astype(out_ref.dtype)
        return h_new

    # Small unroll for LLO scheduler visibility (pick a divisor of TB).
    if TB % 8 == 0:
        unroll = 8
    elif TB % 4 == 0:
        unroll = 4
    elif TB % 2 == 0:
        unroll = 2
    else:
        unroll = 1

    h_final = jax.lax.fori_loop(0, TB, step, h_scratch[...], unroll=unroll)
    h_scratch[...] = h_final

    @pl.when(c == pl.num_programs(1) - 1)
    def _():
        hn_ref[...] = h_final.astype(hn_ref.dtype)


def _pick_time_chunk(T, BT, I, Hp, itemsize, budget_bytes=24 * 1024 * 1024):
    """Largest divisor of T whose per-chunk buffers fit a VMEM budget."""
    best = 1
    for tb in range(1, min(T, 512) + 1):
        if T % tb != 0:
            continue
        # x chunk + out chunk are double-buffered by the pipeline; xw scratch is f32.
        per_chunk = (2 * tb * BT * I * itemsize       # x chunk (2 bufs)
                     + 2 * tb * BT * Hp * itemsize    # out chunk (2 bufs)
                     + tb * BT * Hp * 4)              # xw scratch (f32)
        if per_chunk <= budget_bytes:
            best = tb
    return best


@functools.partial(jax.jit, static_argnames=("time_chunk",))
def gamma_net_forward(x, hidden_prev, w_ih, w_hh, b_ih, b_hh, *, time_chunk=None):
    """x: (B, T, I), hidden_prev: (1, B, H).  Returns (out (B,T,H), hidden_n (1,B,H))."""
    B, T, I = x.shape
    H = w_ih.shape[0]
    dtype = x.dtype

    # ---- pad to TPU-native sizes (exact: padded cols stay 0, padded rows discarded)
    LANE, SUB = 128, 8
    Hp = _round_up(H, LANE)
    Bp = _round_up(B, SUB)
    if Bp > 128:
        Bp = _round_up(B, 128)
    BT = min(Bp, 128)
    num_b_tiles = Bp // BT

    # ---- time chunking
    if time_chunk is None:
        time_chunk = _pick_time_chunk(T, BT, I, Hp, jnp.dtype(dtype).itemsize)
    TB = int(time_chunk)
    if T % TB != 0:
        raise ValueError(f"time_chunk={TB} must divide T={T}")
    num_chunks = T // TB

    # ---- one-time layout / dtype plumbing (plain JAX, outside the kernel)
    x_tm = jnp.transpose(x, (1, 0, 2))                                # (T, B, I)
    x_tm = jnp.pad(x_tm, ((0, 0), (0, Bp - B), (0, 0)))               # (T, Bp, I)
    wih_t = jnp.pad(w_ih.astype(jnp.float32).T, ((0, 0), (0, Hp - H)))            # (I, Hp)
    whh_t = jnp.pad(w_hh.astype(jnp.float32).T, ((0, Hp - H), (0, Hp - H)))       # (Hp, Hp)
    bias = jnp.broadcast_to((b_ih + b_hh).astype(jnp.float32)[None, :], (Bp, H))
    bias = jnp.pad(bias, ((0, 0), (0, Hp - H)))                        # (Bp, Hp)
    h0 = jnp.pad(hidden_prev[0].astype(jnp.float32),
                 ((0, Bp - B), (0, Hp - H)))                           # (Bp, Hp)

    out_tm, hidden_n = pl.pallas_call(
        _rnn_kernel,
        out_shape=(
            jax.ShapeDtypeStruct((T, Bp, Hp), dtype),
            jax.ShapeDtypeStruct((Bp, Hp), dtype),
        ),
        grid_spec=pltpu.PrefetchScalarGridSpec(
            num_scalar_prefetch=0,
            grid=(num_b_tiles, num_chunks),
            in_specs=[
                pl.BlockSpec((TB, BT, I), lambda b, c: (c, b, 0)),    # x chunk
                pl.BlockSpec((I, Hp), lambda b, c: (0, 0)),           # W_ih^T
                pl.BlockSpec((Hp, Hp), lambda b, c: (0, 0)),          # W_hh^T
                pl.BlockSpec((BT, Hp), lambda b, c: (b, 0)),          # bias (pre-broadcast)
                pl.BlockSpec((BT, Hp), lambda b, c: (b, 0)),          # h0
            ],
            out_specs=[
                pl.BlockSpec((TB, BT, Hp), lambda b, c: (c, b, 0)),   # out chunk
                pl.BlockSpec((BT, Hp), lambda b, c: (b, 0)),          # hidden_n
            ],
            scratch_shapes=[
                pltpu.VMEM((BT, Hp), jnp.float32),       # hidden-state carry
                pltpu.VMEM((TB, BT, Hp), jnp.float32),   # chunk input projection
            ],
        ),
        compiler_params=pltpu.CompilerParams(
            # batch tiles are independent ("parallel"); time recurrence is
            # sequential and MUST stay "arbitrary".
            dimension_semantics=("parallel", "arbitrary"),
            vmem_limit_bytes=64 * 1024 * 1024,
        ),
    )(x_tm, wih_t, whh_t, bias, h0)

    out = jnp.transpose(out_tm[:, :B, :H], (1, 0, 2))     # (B, T, H)
    hidden_n = hidden_n[:B, :H][None, :, :]               # (1, B, H)
    return out, hidden_n


def _reference_rnn(x, hidden_prev, w_ih, w_hh, b_ih, b_hh):
    """Pure-JAX reference matching torch.nn.RNN(tanh, batch_first=True)."""
    B, T, I = x.shape
    h = hidden_prev[0].astype(jnp.float32)
    outs = []
    for t in range(T):
        pre = (x[:, t, :].astype(jnp.float32) @ w_ih.T.astype(jnp.float32)
               + h @ w_hh.T.astype(jnp.float32)
               + b_ih.astype(jnp.float32) + b_hh.astype(jnp.float32))
        h = jnp.tanh(pre)
        outs.append(h)
    out = jnp.stack(outs, axis=1).astype(x.dtype)
    return out, h[None].astype(x.dtype)


if __name__ == "__main__":
    key = jax.random.PRNGKey(0)
    B, T, I, H = 2, 8, 16, 32
    std = 0.001  # matches nn.init.normal_(p, mean=0.0, std=0.001)

    k_x, k_h0, k_wih, k_whh, k_bih, k_bhh = jax.random.split(key, 6)
    x = jax.random.normal(k_x, (B, T, I), dtype=jnp.float32)
    hidden_prev = jax.random.normal(k_h0, (1, B, H), dtype=jnp.float32)

    # Deterministic parameter init (shapes from nn.RNN(input_size=I, hidden_size=H)).
    w_ih = std * jax.random.normal(k_wih, (H, I), dtype=jnp.float32)
    w_hh = std * jax.random.normal(k_whh, (H, H), dtype=jnp.float32)
    b_ih = std * jax.random.normal(k_bih, (H,), dtype=jnp.float32)
    b_hh = std * jax.random.normal(k_bhh, (H,), dtype=jnp.float32)

    # time_chunk=4 exercises the cross-chunk hidden-state carry (2 chunks).
    out, h_n = gamma_net_forward(x, hidden_prev, w_ih, w_hh, b_ih, b_hh,
                                 time_chunk=4)
    jax.block_until_ready((out, h_n))

    out_ref, h_ref = _reference_rnn(x, hidden_prev, w_ih, w_hh, b_ih, b_hh)
    assert out.shape == (B, T, H) and h_n.shape == (1, B, H)
    assert jnp.allclose(out, out_ref, atol=1e-5, rtol=1e-5)
    assert jnp.allclose(h_n, h_ref, atol=1e-5, rtol=1e-5)

    # Also exercise the auto-chosen chunk size (TB == T here).
    out2, h_n2 = gamma_net_forward(x, hidden_prev, w_ih, w_hh, b_ih, b_hh)
    jax.block_until_ready((out2, h_n2))
    assert jnp.allclose(out2, out_ref, atol=1e-5, rtol=1e-5)
    assert jnp.allclose(h_n2, h_ref, atol=1e-5, rtol=1e-5)

    print("KERNEL_OK")
</pallas_src>

<mosaic_0001>
module attributes {stable_mosaic.version = 11 : i64} {
  func.func @_rnn_kernel(%arg0: i32, %arg1: i32, %arg2: memref<4x8x16xf32, #tpu.memory_space<vmem>>, %arg3: memref<16x128xf32, #tpu.memory_space<vmem>>, %arg4: memref<128x128xf32, #tpu.memory_space<vmem>>, %arg5: memref<8x128xf32, #tpu.memory_space<vmem>>, %arg6: memref<8x128xf32, #tpu.memory_space<vmem>>, %arg7: memref<4x8x128xf32, #tpu.memory_space<vmem>>, %arg8: memref<8x128xf32, #tpu.memory_space<vmem>>, %arg9: memref<8x128xf32, #tpu.memory_space<vmem>>, %arg10: memref<4x8x128xf32, #tpu.memory_space<vmem>>) attributes {dimension_semantics = [#tpu.dimension_semantics<parallel>, #tpu.dimension_semantics<arbitrary>], iteration_bounds = array<i64: 1, 2>, scalar_prefetch = 0 : i64, scratch_operands = 2 : i64, tpu.core_type = #tpu.core_type<tc>, window_params = [{transform_indices = @transform_0, window_bounds = array<i64: 4, 8, 16>}, {pipeline_mode = #tpu.pipeline_mode<synchronous>, transform_indices = @transform_1, window_bounds = array<i64: 16, 128>}, {pipeline_mode = #tpu.pipeline_mode<synchronous>, transform_indices = @transform_2, window_bounds = array<i64: 128, 128>}, {transform_indices = @transform_3, window_bounds = array<i64: 8, 128>}, {transform_indices = @transform_4, window_bounds = array<i64: 8, 128>}, {transform_indices = @transform_5, window_bounds = array<i64: 4, 8, 128>}, {transform_indices = @transform_6, window_bounds = array<i64: 8, 128>}]} {
    %c0_i32 = arith.constant 0 : i32
    %0 = arith.cmpi eq, %arg1, %c0_i32 : i32
    %1 = arith.extui %0 : i1 to i32
    %c0_i32_0 = arith.constant 0 : i32
    %2 = arith.cmpi ne, %1, %c0_i32_0 : i32
    scf.if %2 {
      %c0_39 = arith.constant 0 : index
      %c0_40 = arith.constant 0 : index
      %59 = vector.load %arg6[%c0_39, %c0_40] : memref<8x128xf32, #tpu.memory_space<vmem>>, vector<8x128xf32>
      %c0_41 = arith.constant 0 : index
      %c0_42 = arith.constant 0 : index
      %60 = vector.load %arg9[%c0_41, %c0_42] : memref<8x128xf32, #tpu.memory_space<vmem>>, vector<8x128xf32>
      tpu.vector_store %arg9[%c0_41, %c0_42], %59 {strides = array<i32>} : memref<8x128xf32, #tpu.memory_space<vmem>>, vector<8x128xf32>,
    } else {
    }
    %c0 = arith.constant 0 : index
    %c0_1 = arith.constant 0 : index
    %c0_2 = arith.constant 0 : index
    %3 = vector.load %arg2[%c0, %c0_1, %c0_2] : memref<4x8x16xf32, #tpu.memory_space<vmem>>, vector<4x8x16xf32>
    %4 = vector.shape_cast %3 : vector<4x8x16xf32> to vector<32x16xf32>
    %c0_3 = arith.constant 0 : index
    %c0_4 = arith.constant 0 : index
    %5 = vector.load %arg3[%c0_3, %c0_4] : memref<16x128xf32, #tpu.memory_space<vmem>>, vector<16x128xf32>
    %cst = arith.constant dense<0.000000e+00> : vector<32x128xf32>
    %6 = tpu.matmul %4, %5, %cst {dimension_numbers = #tpu.dot_dimension_numbers<[1], [0], [0], [1], [0, 0, 1, 1], [], []>} : vector<32x16xf32>, vector<16x128xf32>, vector<32x128xf32> -> vector<32x128xf32>
    %7 = vector.shape_cast %6 : vector<32x128xf32> to vector<4x8x128xf32>
    %c0_5 = arith.constant 0 : index
    %c0_6 = arith.constant 0 : index
    %8 = vector.load %arg5[%c0_5, %c0_6] : memref<8x128xf32, #tpu.memory_space<vmem>>, vector<8x128xf32>
    %9 = vector.shape_cast %8 : vector<8x128xf32> to vector<1x8x128xf32>
    %10 = vector.broadcast %9 : vector<1x8x128xf32> to vector<4x8x128xf32>
    %11 = arith.addf %7, %10 : vector<4x8x128xf32>
    %c0_7 = arith.constant 0 : index
    %c0_8 = arith.constant 0 : index
    %c0_9 = arith.constant 0 : index
    %12 = vector.load %arg10[%c0_7, %c0_8, %c0_9] : memref<4x8x128xf32, #tpu.memory_space<vmem>>, vector<4x8x128xf32>
    tpu.vector_store %arg10[%c0_7, %c0_8, %c0_9], %11 {strides = array<i32>} : memref<4x8x128xf32, #tpu.memory_space<vmem>>, vector<4x8x128xf32>,
    %c0_10 = arith.constant 0 : index
    %c0_11 = arith.constant 0 : index
    %13 = vector.load %arg4[%c0_10, %c0_11] : memref<128x128xf32, #tpu.memory_space<vmem>>, vector<128x128xf32>
    %c0_12 = arith.constant 0 : index
    %c0_13 = arith.constant 0 : index
    %14 = vector.load %arg9[%c0_12, %c0_13] : memref<8x128xf32, #tpu.memory_space<vmem>>, vector<8x128xf32>
    %c0_i32_14 = arith.constant 0 : i32
    %15 = arith.index_cast %c0_i32_14 : i32 to index
    %c0_15 = arith.constant 0 : index
    %c0_16 = arith.constant 0 : index
    %16 = vector.load %arg10[%15, %c0_15, %c0_16] : memref<4x8x128xf32, #tpu.memory_space<vmem>>, vector<1x8x128xf32>
    %17 = vector.shape_cast %16 : vector<1x8x128xf32> to vector<8x128xf32>
    %cst_17 = arith.constant dense<0.000000e+00> : vector<8x128xf32>
    %18 = tpu.matmul %14, %13, %cst_17 {dimension_numbers = #tpu.dot_dimension_numbers<[1], [0], [0], [1], [0, 0, 1, 1], [], []>} : vector<8x128xf32>, vector<128x128xf32>, vector<8x128xf32> -> vector<8x128xf32>
    %19 = arith.addf %17, %18 : vector<8x128xf32>
    %20 = math.tanh %19 : vector<8x128xf32>
    %21 = arith.index_cast %c0_i32_14 : i32 to index
    %c0_18 = arith.constant 0 : index
    %c0_19 = arith.constant 0 : index
    %22 = vector.load %arg7[%21, %c0_18, %c0_19] : memref<4x8x128xf32, #tpu.memory_space<vmem>>, vector<1x8x128xf32>
    %23 = vector.shape_cast %22 : vector<1x8x128xf32> to vector<8x128xf32>
    %24 = vector.shape_cast %20 : vector<8x128xf32> to vector<1x8x128xf32>
    tpu.vector_store %arg7[%21, %c0_18, %c0_19], %24 {strides = array<i32>} : memref<4x8x128xf32, #tpu.memory_space<vmem>>, vector<1x8x128xf32>,
    %c1_i32 = arith.constant 1 : i32
    %25 = arith.index_cast %c1_i32 : i32 to index
    %c0_20 = arith.constant 0 : index
    %c0_21 = arith.constant 0 : index
    %26 = vector.load %arg10[%25, %c0_20, %c0_21] : memref<4x8x128xf32, #tpu.memory_space<vmem>>, vector<1x8x128xf32>
    %27 = vector.shape_cast %26 : vector<1x8x128xf32> to vector<8x128xf32>
    %cst_22 = arith.constant dense<0.000000e+00> : vector<8x128xf32>
    %28 = tpu.matmul %20, %13, %cst_22 {dimension_numbers = #tpu.dot_dimension_numbers<[1], [0], [0], [1], [0, 0, 1, 1], [], []>} : vector<8x128xf32>, vector<128x128xf32>, vector<8x128xf32> -> vector<8x128xf32>
    %29 = arith.addf %27, %28 : vector<8x128xf32>
    %30 = math.tanh %29 : vector<8x128xf32>
    %31 = arith.index_cast %c1_i32 : i32 to index
    %c0_23 = arith.constant 0 : index
    %c0_24 = arith.constant 0 : index
    %32 = vector.load %arg7[%31, %c0_23, %c0_24] : memref<4x8x128xf32, #tpu.memory_space<vmem>>, vector<1x8x128xf32>
    %33 = vector.shape_cast %32 : vector<1x8x128xf32> to vector<8x128xf32>
    %34 = vector.shape_cast %30 : vector<8x128xf32> to vector<1x8x128xf32>
    tpu.vector_store %arg7[%31, %c0_23, %c0_24], %34 {strides = array<i32>} : memref<4x8x128xf32, #tpu.memory_space<vmem>>, vector<1x8x128xf32>,
    %c2_i32 = arith.constant 2 : i32
    %35 = arith.index_cast %c2_i32 : i32 to index
    %c0_25 = arith.constant 0 : index
    %c0_26 = arith.constant 0 : index
    %36 = vector.load %arg10[%35, %c0_25, %c0_26] : memref<4x8x128xf32, #tpu.memory_space<vmem>>, vector<1x8x128xf32>
    %37 = vector.shape_cast %36 : vector<1x8x128xf32> to vector<8x128xf32>
    %cst_27 = arith.constant dense<0.000000e+00> : vector<8x128xf32>
    %38 = tpu.matmul %30, %13, %cst_27 {dimension_numbers = #tpu.dot_dimension_numbers<[1], [0], [0], [1], [0, 0, 1, 1], [], []>} : vector<8x128xf32>, vector<128x128xf32>, vector<8x128xf32> -> vector<8x128xf32>
    %39 = arith.addf %37, %38 : vector<8x128xf32>
    %40 = math.tanh %39 : vector<8x128xf32>
    %41 = arith.index_cast %c2_i32 : i32 to index
    %c0_28 = arith.constant 0 : index
    %c0_29 = arith.constant 0 : index
    %42 = vector.load %arg7[%41, %c0_28, %c0_29] : memref<4x8x128xf32, #tpu.memory_space<vmem>>, vector<1x8x128xf32>
    %43 = vector.shape_cast %42 : vector<1x8x128xf32> to vector<8x128xf32>
    %44 = vector.shape_cast %40 : vector<8x128xf32> to vector<1x8x128xf32>
    tpu.vector_store %arg7[%41, %c0_28, %c0_29], %44 {strides = array<i32>} : memref<4x8x128xf32, #tpu.memory_space<vmem>>, vector<1x8x128xf32>,
    %c3_i32 = arith.constant 3 : i32
    %45 = arith.index_cast %c3_i32 : i32 to index
    %c0_30 = arith.constant 0 : index
    %c0_31 = arith.constant 0 : index
    %46 = vector.load %arg10[%45, %c0_30, %c0_31] : memref<4x8x128xf32, #tpu.memory_space<vmem>>, vector<1x8x128xf32>
    %47 = vector.shape_cast %46 : vector<1x8x128xf32> to vector<8x128xf32>
    %cst_32 = arith.constant dense<0.000000e+00> : vector<8x128xf32>
    %48 = tpu.matmul %40, %13, %cst_32 {dimension_numbers = #tpu.dot_dimension_numbers<[1], [0], [0], [1], [0, 0, 1, 1], [], []>} : vector<8x128xf32>, vector<128x128xf32>, vector<8x128xf32> -> vector<8x128xf32>
    %49 = arith.addf %47, %48 : vector<8x128xf32>
    %50 = math.tanh %49 : vector<8x128xf32>
    %51 = arith.index_cast %c3_i32 : i32 to index
    %c0_33 = arith.constant 0 : index
    %c0_34 = arith.constant 0 : index
    %52 = vector.load %arg7[%51, %c0_33, %c0_34] : memref<4x8x128xf32, #tpu.memory_space<vmem>>, vector<1x8x128xf32>
    %53 = vector.shape_cast %52 : vector<1x8x128xf32> to vector<8x128xf32>
    %54 = vector.shape_cast %50 : vector<8x128xf32> to vector<1x8x128xf32>
    tpu.vector_store %arg7[%51, %c0_33, %c0_34], %54 {strides = array<i32>} : memref<4x8x128xf32, #tpu.memory_space<vmem>>, vector<1x8x128xf32>,
    %c4_i32 = arith.constant 4 : i32
    %c0_35 = arith.constant 0 : index
    %c0_36 = arith.constant 0 : index
    %55 = vector.load %arg9[%c0_35, %c0_36] : memref<8x128xf32, #tpu.memory_space<vmem>>, vector<8x128xf32>
    tpu.vector_store %arg9[%c0_35, %c0_36], %50 {strides = array<i32>} : memref<8x128xf32, #tpu.memory_space<vmem>>, vector<8x128xf32>,
    %c1_i32_37 = arith.constant 1 : i32
    %56 = arith.cmpi eq, %arg1, %c1_i32_37 : i32
    %57 = arith.extui %56 : i1 to i32
    %c0_i32_38 = arith.constant 0 : i32
    %58 = arith.cmpi ne, %57, %c0_i32_38 : i32
    scf.if %58 {
      %c0_39 = arith.constant 0 : index
      %c0_40 = arith.constant 0 : index
      %59 = vector.load %arg8[%c0_39, %c0_40] : memref<8x128xf32, #tpu.memory_space<vmem>>, vector<8x128xf32>
      tpu.vector_store %arg8[%c0_39, %c0_40], %50 {strides = array<i32>} : memref<8x128xf32, #tpu.memory_space<vmem>>, vector<8x128xf32>,
    } else {
    }
    return
  }
  func.func @transform_0(%arg0: i32, %arg1: i32) -> (i32, i32, i32) {
    %c0_i32 = arith.constant 0 : i32
    %c0_i32_0 = arith.constant 0 : i32
    return %arg1, %arg0, %c0_i32 : i32, i32, i32
  }
  func.func @transform_1(%arg0: i32, %arg1: i32) -> (i32, i32) {
    %c0_i32 = arith.constant 0 : i32
    %c0_i32_0 = arith.constant 0 : i32
    %c0_i32_1 = arith.constant 0 : i32
    return %c0_i32, %c0_i32_0 : i32, i32
  }
  func.func @transform_2(%arg0: i32, %arg1: i32) -> (i32, i32) {
    %c0_i32 = arith.constant 0 : i32
    %c0_i32_0 = arith.constant 0 : i32
    %c0_i32_1 = arith.constant 0 : i32
    return %c0_i32, %c0_i32_0 : i32, i32
  }
  func.func @transform_3(%arg0: i32, %arg1: i32) -> (i32, i32) {
    %c0_i32 = arith.constant 0 : i32
    %c0_i32_0 = arith.constant 0 : i32
    return %arg0, %c0_i32 : i32, i32
  }
  func.func @transform_4(%arg0: i32, %arg1: i32) -> (i32, i32) {
    %c0_i32 = arith.constant 0 : i32
    %c0_i32_0 = arith.constant 0 : i32
    return %arg0, %c0_i32 : i32, i32
  }
  func.func @transform_5(%arg0: i32, %arg1: i32) -> (i32, i32, i32) {
    %c0_i32 = arith.constant 0 : i32
    %c0_i32_0 = arith.constant 0 : i32
    return %arg1, %arg0, %c0_i32 : i32, i32, i32
  }
  func.func @transform_6(%arg0: i32, %arg1: i32) -> (i32, i32) {
    %c0_i32 = arith.constant 0 : i32
    %c0_i32_0 = arith.constant 0 : i32
    return %arg0, %c0_i32 : i32, i32
  }
}

</mosaic_0001>

<llo_original>
// kernel: gamma_net_forward.1
$region0: #{gamma_net_forward.1}
  #allocation0 [shape = 'u32[]', space=smem, size = 0x4, offset = 0x4, fixed_abs, tag = 'smem constant byte address 0x4 - core index']
  #allocation1 [shape = 'u32[144,128]{1,0:T(1,128)}', space=vmem, size = 0x12000, scoped, tag = 'internal scratch']
  #allocation2 [shape = 'f32[8,128]{1,0:T(8,128)}', space=vmem, size = 0x1000, scoped, tag = 'scratch operand']
  #allocation3 [shape = 'f32[4,8,128]{2,1,0:T(8,128)}', space=vmem, size = 0x4000, scoped, tag = 'scratch operand']
  %s0 = inlined_call_operand.hbm [shape: f32[8,8,16], index: 0, kind: input, shape index: {}]
  %s1 = inlined_call_operand.hbm [shape: f32[16,128], index: 1, kind: input, shape index: {}]
  %s2 = inlined_call_operand.hbm [shape: f32[128,128], index: 2, kind: input, shape index: {}]
  %s3 = inlined_call_operand.hbm [shape: f32[8,128], index: 3, kind: input, shape index: {}]
  %s4 = inlined_call_operand.hbm [shape: f32[8,128], index: 4, kind: input, shape index: {}]
  %s5 = inlined_call_operand.hbm [shape: f32[8,8,128], index: 5, kind: output, shape index: {0}]
  %s6 = inlined_call_operand.hbm [shape: f32[8,128], index: 6, kind: output, shape index: {1}]
  %7 = xla_tuple %s5, %s6
  %s8 = sld [smem:[#allocation0]]
  $region89: #{gamma_net_forward.1} parent=0
    _
  %s10 = ssub.s32 1, %s8
  %s11 = scalar_select 0, %s10, %s8
  $region1: #{gamma_net_forward.1} parent=0
    #allocation4 [shape = 'u8[32768]{0}', space=vmem, size = 0x8000, scoped, tag = 'input window, operand 0']
    #allocation5 [shape = 's32[2]{0}', space=sflag, size = 0x8, scoped, tag = 'scoped memory for gamma_net_forward.1']
    #allocation6 [shape = 's32[2]{0}', space=sflag, size = 0x8, scoped, tag = 'scoped memory for gamma_net_forward.1']
    #allocation7 [shape = 'u8[8192]{0}', space=vmem, size = 0x2000, scoped, tag = 'input window, operand 1, single buffered']
    #allocation8 [shape = 's32[1]{0}', space=sflag, size = 0x4, scoped, tag = 'scoped memory for gamma_net_forward.1']
    #allocation9 [shape = 'u8[65536]{0}', space=vmem, size = 0x10000, scoped, tag = 'input window, operand 2, single buffered']
    #allocation10 [shape = 'u8[4096]{0}', space=vmem, size = 0x1000, scoped, tag = 'input window, operand 3, single buffered']
    #allocation11 [shape = 's32[1]{0}', space=sflag, size = 0x4, scoped, tag = 'scoped memory for gamma_net_forward.1']
    #allocation12 [shape = 'u8[4096]{0}', space=vmem, size = 0x1000, scoped, tag = 'input window, operand 4, single buffered']
    #allocation13 [shape = 'u8[32768]{0}', space=vmem, size = 0x8000, scoped, tag = 'output window, operand 0']
    #allocation14 [shape = 'u8[4096]{0}', space=vmem, size = 0x1000, scoped, tag = 'output window, operand 1, single buffered']
    #allocation15 [shape = 's32[1]{0}', space=sflag, size = 0x4, scoped, tag = 'scoped memory for gamma_net_forward.1']
    %12 = vsyncpa [#allocation5], 0
    %s13 = scalar_lea.sflag [#allocation5], 1
    %14 = vsyncpa %s13, 0
    %15 = vsyncpa [#allocation8], 0
    %16 = vsyncpa [#allocation11], 0
    %17 = vsyncpa [#allocation6], 0
    %s18 = scalar_lea.sflag [#allocation6], 1
    %19 = vsyncpa %s18, 0
    %20 = vsyncpa [#allocation15], 0
    loop: start=0, step=1, limit=4
    $region2: #{gamma_net_forward.1} parent=1 // loop_pre_header
      _
    $region3: #{gamma_net_forward.1} parent=1 // loop_header
      %s22 = sphi 0, %s26
      %p23 = scmp.ge.s32.totalorder %s22, 4
      %s29 = sphi 0, %s41
      %s30 = sphi 0, %s37
      %s31 = sphi 0, %s29
      %s32 = sphi 0, %s30
      %s33 = sphi 0, %s31
      %s34 = sphi 0, %s32
      %s46 = sphi 0, %s48
      %s49 = sphi 0, %s46
      %s50 = sphi 0, %s49
      %s66 = sphi 0, %s50
      %s70 = sphi 0, %s70
      %s72 = sphi 0, %s70
      %s73 = sphi 0, %s72
      %s87 = sphi 0, %s73
      %s91 = sphi 0, %s91
      %s93 = sphi 0, %s91
      %s94 = sphi 0, %s93
      %s108 = sphi 0, %s94
      %s114 = sphi 0, %s116
      %s117 = sphi 0, %s114
      %s118 = sphi 0, %s117
      %s134 = sphi 0, %s118
      %s140 = sphi 0, %s142
      %s143 = sphi 0, %s140
      %s144 = sphi 0, %s143
      %s160 = sphi 0, %s144
      %s168 = sphi 0, %s170
      %s171 = sphi 0, %s168
      %s172 = sphi 0, %s171
      %s188 = sphi 0, %s172
      %s194 = sphi 0, %s196
      %s197 = sphi 0, %s194
      %s198 = sphi 0, %s197
      %s214 = sphi 0, %s198
    $region4: #{gamma_net_forward.1} parent=1 // loop_header_branch
      %25 = sbr.rel (%p23) target = $region8
    $region5: #{gamma_net_forward.1} parent=1 // loop_body
      %s27 = ssub.s32 %s22, 1
      %s28 = ssub.s32 %s22, 2
      %s35 = sadd.s32 1, %s30
      %p36 = scmp.ge.s32.totalorder %s35, 2
      %s37 = scalar_select %p36, 0, %s35
      %s38 = sadd.s32 1, %s29
      %s39 = scalar_select %p36, %s38, %s29
      %p40 = scmp.ge.s32.totalorder %s39, 1
      %s41 = scalar_select %p40, 0, %s39
      %s42 = ssub.s32 %s30, %s37
      %s43 = ssub.s32 %s29, %s41
      %s44 = sor.u32 %s42, %s43
      %p45 = scmp.eq.s32.totalorder %s44, 0
      %s47 = sadd.s32 %s46, 1
      %s48 = scalar_select %p45, %s46, %s47
      %p51 = pneg %p45
      %p52 = scmp.eq.s32.totalorder %s22, 1
      %p53 = por %p51, %p52
      %p54 = scmp.ne.s32.totalorder %s46, %s49
      %p55 = scmp.eq.s32.totalorder %s22, 0
      %p56 = por %p54, %p55
      %p57 = scmp.ne.s32.totalorder %s46, %s49
      %p58 = scmp.eq.s32.totalorder %s27, 1
      %p59 = por %p57, %p58
      %p60 = scmp.ne.s32.totalorder %s49, %s50
      %p61 = scmp.eq.s32.totalorder %s27, 0
      %p62 = por %p60, %p61
      %p63 = scmp.ne.s32.totalorder %s49, %s50
      %p64 = scmp.eq.s32.totalorder %s28, 1
      %p65 = por %p63, %p64
      %p67 = scmp.ne.s32.totalorder %s50, %s66
      %p68 = scmp.eq.s32.totalorder %s28, 0
      %p69 = por %p67, %p68
      %s71 = sadd.s32 %s70, 1
      %p74 = scmp.eq.s32.totalorder %s22, 1
      %p75 = scmp.ne.s32.totalorder %s70, %s72
      %p76 = scmp.eq.s32.totalorder %s22, 0
      %p77 = por %p75, %p76
      %p78 = scmp.ne.s32.totalorder %s70, %s72
      %p79 = scmp.eq.s32.totalorder %s27, 1
      %p80 = por %p78, %p79
      %p81 = scmp.ne.s32.totalorder %s72, %s73
      %p82 = scmp.eq.s32.totalorder %s27, 0
      %p83 = por %p81, %p82
      %p84 = scmp.ne.s32.totalorder %s72, %s73
      %p85 = scmp.eq.s32.totalorder %s28, 1
      %p86 = por %p84, %p85
      %p88 = scmp.ne.s32.totalorder %s73, %s87
      %p89 = scmp.eq.s32.totalorder %s28, 0
      %p90 = por %p88, %p89
      %s92 = sadd.s32 %s91, 1
      %p95 = scmp.eq.s32.totalorder %s22, 1
      %p96 = scmp.ne.s32.totalorder %s91, %s93
      %p97 = scmp.eq.s32.totalorder %s22, 0
      %p98 = por %p96, %p97
      %p99 = scmp.ne.s32.totalorder %s91, %s93
      %p100 = scmp.eq.s32.totalorder %s27, 1
      %p101 = por %p99, %p100
      %p102 = scmp.ne.s32.totalorder %s93, %s94
      %p103 = scmp.eq.s32.totalorder %s27, 0
      %p104 = por %p102, %p103
      %p105 = scmp.ne.s32.totalorder %s93, %s94
      %p106 = scmp.eq.s32.totalorder %s28, 1
      %p107 = por %p105, %p106
      %p109 = scmp.ne.s32.totalorder %s94, %s108
      %p110 = scmp.eq.s32.totalorder %s28, 0
      %p111 = por %p109, %p110
      %s112 = ssub.s32 %s29, %s41
      %p113 = scmp.eq.s32.totalorder %s112, 0
      %s115 = sadd.s32 %s114, 1
      %s116 = scalar_select %p113, %s114, %s115
      %p119 = pneg %p113
      %p120 = scmp.eq.s32.totalorder %s22, 1
      %p121 = por %p119, %p120
      %p122 = scmp.ne.s32.totalorder %s114, %s117
      %p123 = scmp.eq.s32.totalorder %s22, 0
      %p124 = por %p122, %p123
      %p125 = scmp.ne.s32.totalorder %s114, %s117
      %p126 = scmp.eq.s32.totalorder %s27, 1
      %p127 = por %p125, %p126
      %p128 = scmp.ne.s32.totalorder %s117, %s118
      %p129 = scmp.eq.s32.totalorder %s27, 0
      %p130 = por %p128, %p129
      %p131 = scmp.ne.s32.totalorder %s117, %s118
      %p132 = scmp.eq.s32.totalorder %s28, 1
      %p133 = por %p131, %p132
      %p135 = scmp.ne.s32.totalorder %s118, %s134
      %p136 = scmp.eq.s32.totalorder %s28, 0
      %p137 = por %p135, %p136
      %s138 = ssub.s32 %s29, %s41
      %p139 = scmp.eq.s32.totalorder %s138, 0
      %s141 = sadd.s32 %s140, 1
      %s142 = scalar_select %p139, %s140, %s141
      %p145 = pneg %p139
      %p146 = scmp.eq.s32.totalorder %s22, 1
      %p147 = por %p145, %p146
      %p148 = scmp.ne.s32.totalorder %s140, %s143
      %p149 = scmp.eq.s32.totalorder %s22, 0
      %p150 = por %p148, %p149
      %p151 = scmp.ne.s32.totalorder %s140, %s143
      %p152 = scmp.eq.s32.totalorder %s27, 1
      %p153 = por %p151, %p152
      %p154 = scmp.ne.s32.totalorder %s143, %s144
      %p155 = scmp.eq.s32.totalorder %s27, 0
      %p156 = por %p154, %p155
      %p157 = scmp.ne.s32.totalorder %s143, %s144
      %p158 = scmp.eq.s32.totalorder %s28, 1
      %p159 = por %p157, %p158
      %p161 = scmp.ne.s32.totalorder %s144, %s160
      %p162 = scmp.eq.s32.totalorder %s28, 0
      %p163 = por %p161, %p162
      %s164 = ssub.s32 %s30, %s37
      %s165 = ssub.s32 %s29, %s41
      %s166 = sor.u32 %s164, %s165
      %p167 = scmp.eq.s32.totalorder %s166, 0
      %s169 = sadd.s32 %s168, 1
      %s170 = scalar_select %p167, %s168, %s169
      %p173 = pneg %p167
      %p174 = scmp.eq.s32.totalorder %s22, 1
      %p175 = por %p173, %p174
      %p176 = scmp.ne.s32.totalorder %s168, %s171
      %p177 = scmp.eq.s32.totalorder %s22, 0
      %p178 = por %p176, %p177
      %p179 = scmp.ne.s32.totalorder %s168, %s171
      %p180 = scmp.eq.s32.totalorder %s27, 1
      %p181 = por %p179, %p180
      %p182 = scmp.ne.s32.totalorder %s171, %s172
      %p183 = scmp.eq.s32.totalorder %s27, 0
      %p184 = por %p182, %p183
      %p185 = scmp.ne.s32.totalorder %s171, %s172
      %p186 = scmp.eq.s32.totalorder %s28, 1
      %p187 = por %p185, %p186
      %p189 = scmp.ne.s32.totalorder %s172, %s188
      %p190 = scmp.eq.s32.totalorder %s28, 0
      %p191 = por %p189, %p190
      %s192 = ssub.s32 %s29, %s41
      %p193 = scmp.eq.s32.totalorder %s192, 0
      %s195 = sadd.s32 %s194, 1
      %s196 = scalar_select %p193, %s194, %s195
      %p199 = pneg %p193
      %p200 = scmp.eq.s32.totalorder %s22, 1
      %p201 = por %p199, %p200
      %p202 = scmp.ne.s32.totalorder %s194, %s197
      %p203 = scmp.eq.s32.totalorder %s22, 0
      %p204 = por %p202, %p203
      %p205 = scmp.ne.s32.totalorder %s194, %s197
      %p206 = scmp.eq.s32.totalorder %s27, 1
      %p207 = por %p205, %p206
      %p208 = scmp.ne.s32.totalorder %s197, %s198
      %p209 = scmp.eq.s32.totalorder %s27, 0
      %p210 = por %p208, %p209
      %p211 = scmp.ne.s32.totalorder %s197, %s198
      %p212 = scmp.eq.s32.totalorder %s28, 1
      %p213 = por %p211, %p212
      %p215 = scmp.ne.s32.totalorder %s198, %s214
      %p216 = scmp.eq.s32.totalorder %s28, 0
      %p217 = por %p215, %p216
      %p218 = scmp.le.s32.totalorder 1, %s22
      %p219 = scmp.lt.s32.totalorder %s22, 3
      %p220 = pnand %p218, %p219
      %p221 = pneg %p220
      // Predicated region
      $region9: #{gamma_net_forward.1} parent=5 // pred_check
        _
      $region10: #{gamma_net_forward.1} parent=5 // pred_check_branch
        %223 = sbr.rel (%p220) target = $region12
      $region11: #{gamma_net_forward.1} parent=5 // pred_region
        %s224 = ssub.s32 %s22, 1
        // Predicated region
        $region13: #{gamma_net_forward.1} parent=11 // pred_check
          %p225 = pneg %p83
        $region14: #{gamma_net_forward.1} parent=11 // pred_check_branch
          %227 = sbr.rel (%p225) target = $region16
        $region15: #{gamma_net_forward.1} parent=11 // pred_region
          %s229 = ssub.s32 256, 256
          %230 = vsyncadd [#allocation8], %s229
          %s231 = sshll.u32 [#allocation7], 4
          %s232 = int_to_ptr.vmem [resolvable:$true] %s231
          %237 = dma.hbm_to_vmem [thread:$0]  %s1, 256, %s232, [#allocation8], 128, 128, 8
        $region16: #{gamma_net_forward.1} parent=11 // pred_fallthru
          _
        // Predicated region
        $region17: #{gamma_net_forward.1} parent=11 // pred_check
          %p238 = pneg %p104
        $region18: #{gamma_net_forward.1} parent=11 // pred_check_branch
          %240 = sbr.rel (%p238) target = $region20
        $region19: #{gamma_net_forward.1} parent=11 // pred_region
          %s242 = ssub.s32 2048, 2048
          %243 = vsyncadd [#allocation8], %s242
          %s244 = sshll.u32 [#allocation9], 4
          %s245 = int_to_ptr.vmem [resolvable:$true] %s244
          %250 = dma.hbm_to_vmem [thread:$0]  %s2, 2048, %s245, [#allocation8], 128, 128, 8
        $region20: #{gamma_net_forward.1} parent=11 // pred_fallthru
          _
        // Predicated region
        $region21: #{gamma_net_forward.1} parent=11 // pred_check
          %p251 = pneg %p130
        $region22: #{gamma_net_forward.1} parent=11 // pred_check_branch
          %253 = sbr.rel (%p251) target = $region24
        $region23: #{gamma_net_forward.1} parent=11 // pred_region
          %s255 = ssub.s32 128, 128
          %256 = vsyncadd [#allocation11], %s255
          %s257 = smul.addr %s31, 128
          %s258 = scalar_lea.hbm %s3, %s257
          %s260 = sshll.u32 [#allocation10], 4
          %s261 = int_to_ptr.vmem [resolvable:$true] %s260
          %263 = dma.hbm_to_vmem [thread:$0]  %s258, 128, %s261, [#allocation11]
        $region24: #{gamma_net_forward.1} parent=11 // pred_fallthru
          _
        // Predicated region
        $region25: #{gamma_net_forward.1} parent=11 // pred_check
          %p264 = pneg %p156
        $region26: #{gamma_net_forward.1} parent=11 // pred_check_branch
          %266 = sbr.rel (%p264) target = $region28
        $region27: #{gamma_net_forward.1} parent=11 // pred_region
          %s268 = ssub.s32 128, 128
          %269 = vsyncadd [#allocation11], %s268
          %s270 = smul.addr %s31, 128
          %s271 = scalar_lea.hbm %s4, %s270
          %s273 = sshll.u32 [#allocation12], 4
          %s274 = int_to_ptr.vmem [resolvable:$true] %s273
          %276 = dma.hbm_to_vmem [thread:$0]  %s271, 128, %s274, [#allocation11]
        $region28: #{gamma_net_forward.1} parent=11 // pred_fallthru
          _
      $region12: #{gamma_net_forward.1} parent=5 // pred_fallthru
        _
      %p277 = scmp.lt.s32.totalorder %s22, 2
      // Predicated region
      $region29: #{gamma_net_forward.1} parent=5 // pred_check
        %p278 = pneg %p277
      $region30: #{gamma_net_forward.1} parent=5 // pred_check_branch
        %280 = sbr.rel (%p278) target = $region32
      $region31: #{gamma_net_forward.1} parent=5 // pred_region
        // Predicated region
        $region33: #{gamma_net_forward.1} parent=31 // pred_check
          %p281 = pneg %p56
        $region34: #{gamma_net_forward.1} parent=31 // pred_check_branch
          %283 = sbr.rel (%p281) target = $region36
        $region35: #{gamma_net_forward.1} parent=31 // pred_region
          %s284 = sand.u32 %s46, 1
          %s285 = scalar_lea.sflag [#allocation5], %s284
          %s286 = sand.u32 %s46, 1
          %s287 = smul.addr %s286, 32
          %s288 = scalar_lea.vmem [#allocation4], %s287
          %s289 = smul.u32 4, %s30
          %s291 = ssub.s32 512, 512
          %292 = vsyncadd %s285, %s291
          %s293 = sadd.s32 %s29, %s289
          %s294 = smul.addr %s293, 128
          %s295 = scalar_lea.hbm %s0, %s294
          %s296 = sshll.u32 %s288, 4
          %s297 = int_to_ptr.vmem [resolvable:$true] %s296
          %302 = dma.hbm_to_vmem [thread:$0]  %s295, 512, %s297, %s285, 128, 128, 8
        $region36: #{gamma_net_forward.1} parent=31 // pred_fallthru
          _
      $region32: #{gamma_net_forward.1} parent=5 // pred_fallthru
        _
      %p303 = scmp.le.s32.totalorder 1, %s22
      %p304 = scmp.lt.s32.totalorder %s22, 3
      %p305 = pnand %p303, %p304
      %p306 = pneg %p305
      // Predicated region
      $region37: #{gamma_net_forward.1} parent=5 // pred_check
        _
      $region38: #{gamma_net_forward.1} parent=5 // pred_check_branch
        %308 = sbr.rel (%p305) target = $region40
      $region39: #{gamma_net_forward.1} parent=5 // pred_region
        %s309 = ssub.s32 %s22, 1
        %s310 = sand.u32 %s49, 1
        %s311 = scalar_lea.sflag [#allocation5], %s310
        %s312 = sand.u32 %s49, 1
        %s313 = smul.addr %s312, 32
        %s314 = scalar_lea.vmem [#allocation4], %s313
        // Predicated region
        $region41: #{gamma_net_forward.1} parent=39 // pred_check
          %p315 = pneg %p62
        $region42: #{gamma_net_forward.1} parent=39 // pred_check_branch
          %317 = sbr.rel (%p315) target = $region44
        $region43: #{gamma_net_forward.1} parent=39 // pred_region
          %318 = dma.done %s311, 512
        $region44: #{gamma_net_forward.1} parent=39 // pred_fallthru
          _
        // Predicated region
        $region45: #{gamma_net_forward.1} parent=39 // pred_check
          %p319 = pneg %p83
        $region46: #{gamma_net_forward.1} parent=39 // pred_check_branch
          %321 = sbr.rel (%p319) target = $region48
        $region47: #{gamma_net_forward.1} parent=39 // pred_region
          %322 = dma.done [#allocation8], 256
        $region48: #{gamma_net_forward.1} parent=39 // pred_fallthru
          _
        // Predicated region
        $region49: #{gamma_net_forward.1} parent=39 // pred_check
          %p323 = pneg %p104
        $region50: #{gamma_net_forward.1} parent=39 // pred_check_branch
          %325 = sbr.rel (%p323) target = $region52
        $region51: #{gamma_net_forward.1} parent=39 // pred_region
          %326 = dma.done [#allocation8], 2048
        $region52: #{gamma_net_forward.1} parent=39 // pred_fallthru
          _
        // Predicated region
        $region53: #{gamma_net_forward.1} parent=39 // pred_check
          %p327 = pneg %p130
        $region54: #{gamma_net_forward.1} parent=39 // pred_check_branch
          %329 = sbr.rel (%p327) target = $region56
        $region55: #{gamma_net_forward.1} parent=39 // pred_region
          %330 = dma.done [#allocation11], 128
        $region56: #{gamma_net_forward.1} parent=39 // pred_fallthru
          _
        // Predicated region
        $region57: #{gamma_net_forward.1} parent=39 // pred_check
          %p331 = pneg %p156
        $region58: #{gamma_net_forward.1} parent=39 // pred_check_branch
          %333 = sbr.rel (%p331) target = $region60
        $region59: #{gamma_net_forward.1} parent=39 // pred_region
          %334 = dma.done [#allocation11], 128
        $region60: #{gamma_net_forward.1} parent=39 // pred_fallthru
          _
        %s335 = sand.u32 %s49, 1
        %s336 = scalar_lea.sflag [#allocation5], %s335
        %s337 = sand.u32 %s49, 1
        %s338 = smul.addr %s337, 32
        %s339 = scalar_lea.vmem [#allocation4], %s338
        %p340 = pneg %p62
        %p341 = pneg %p59
        %p342 = pneg %p83
        %p343 = pneg %p80
        %p344 = pneg %p104
        %p345 = pneg %p101
        %p346 = pneg %p130
        %p347 = pneg %p127
        %p348 = pneg %p156
        %p349 = pneg %p153
        %p350 = pneg %p184
        %p351 = pneg %p181
        %s352 = sand.u32 %s171, 1
        %s353 = scalar_lea.sflag [#allocation6], %s352
        %s354 = sand.u32 %s171, 1
        %s355 = smul.addr %s354, 32
        %s356 = scalar_lea.vmem [#allocation13], %s355
        %p357 = pneg %p210
        %p358 = pneg %p207
        %s359 = smul.u32 4, %s32
        %s360 = smul.u32 4, %s32
        %p361 = scmp.eq.s32.totalorder %s32, 0
        // Predicated region
        $region61: #{gamma_net_forward.1} parent=39 // pred_check
          %p362 = pneg %p361
        $region62: #{gamma_net_forward.1} parent=39 // pred_check_branch
          %364 = sbr.rel (%p362) target = $region64
        $region63: #{gamma_net_forward.1} parent=39 // pred_region
          %v365 = vld [vmem:[#allocation12] sm:$0xff]
          %366 = vst [vmem:[#allocation2] sm:$0xff] %v365
        $region64: #{gamma_net_forward.1} parent=39 // pred_fallthru
          _
        %v367 = vld [vmem:[%s314] sm:$0xff]
        %v368 = vld [vmem:[%s314 + $0x8] sm:$0xff]
        %v369 = vld [vmem:[%s314 + $0x10] sm:$0xff]
        %v370 = vld [vmem:[%s314 + $0x18] sm:$0xff]
        %v371 = vld [vmem:[#allocation7] sm:$0xff]
        %v372 = vld [vmem:[#allocation7 + $0x8] sm:$0xff]
        %vm373 = vcmask 130048
        %v375 = vsel %vm373, %v367, 0
        %v378 = vsel %vm373, %v368, 0
        %v381 = vsel %vm373, %v369, 0
        %v384 = vsel %vm373, %v370, 0
        %386 = vmatprep.subr.mxu0 0.0
        %387 = vmatpush1.msra.mxu0 %v371
        %388 = vmatprep.subr.mxu0 0.0
        %389 = vmatpush1.msra.mxu0 %v372
        %390 = vmatprep.subr.mxu0 0.0
        %391 = vmatpush1.msra.mxu0 0.0
        %392 = vmatprep.subr.mxu0 0.0
        %393 = vmatpush1.msra.mxu0 0.0
        %394 = vmatprep.subr.mxu0 0.0
        %395 = vmatpush1.msra.mxu0 0.0
        %396 = vmatprep.subr.mxu0 0.0
        %397 = vmatpush1.msra.mxu0 0.0
        %398 = vmatprep.subr.mxu0 0.0
        %399 = vmatpush1.msra.mxu0 0.0
        %400 = vmatprep.subr.mxu0 0.0
        %401 = vmatpush1.msra.mxu0 0.0
        %402 = vmatprep.subr.mxu0 0.0
        %403 = vmatpush1.msra.mxu0 0.0
        %404 = vmatprep.subr.mxu0 0.0
        %405 = vmatpush1.msra.mxu0 0.0
        %406 = vmatprep.subr.mxu0 0.0
        %407 = vmatpush1.msra.mxu0 0.0
        %408 = vmatprep.subr.mxu0 0.0
        %409 = vmatpush1.msra.mxu0 0.0
        %410 = vmatprep.subr.mxu0 0.0
        %411 = vmatpush1.msra.mxu0 0.0
        %412 = vmatprep.subr.mxu0 0.0
        %413 = vmatpush1.msra.mxu0 0.0
        %414 = vmatprep.subr.mxu0 0.0
        %415 = vmatpush1.msra.mxu0 0.0
        %416 = vmatprep.subr.mxu0 0.0
        %417 = vmatpush1.msra.mxu0 0.0
        %418 = vmatprep.subr.mxu0 0.0
        %419 = vmatpush1.msra.mxu0 0.0
        %420 = vmatprep.subr.mxu0 0.0
        %421 = vmatpush1.msra.mxu0 0.0
        %422 = vmatprep.subr.mxu0 0.0
        %423 = vmatpush1.msra.mxu0 0.0
        %424 = vmatprep.subr.mxu0 0.0
        %425 = vmatpush1.msra.mxu0 0.0
        %426 = vmatprep.subr.mxu0 0.0
        %427 = vmatpush1.msra.mxu0 0.0
        %428 = vmatprep.subr.mxu0 0.0
        %429 = vmatpush1.msra.mxu0 0.0
        %430 = vmatprep.subr.mxu0 0.0
        %431 = vmatpush1.msra.mxu0 0.0
        %432 = vmatprep.subr.mxu0 0.0
        %433 = vmatpush1.msra.mxu0 0.0
        %434 = vmatprep.subr.mxu0 0.0
        %435 = vmatpush1.msra.mxu0 0.0
        %436 = vmatprep.subr.mxu0 0.0
        %437 = vmatpush1.msra.mxu0 0.0
        %438 = vmatprep.subr.mxu0 0.0
        %439 = vmatpush1.msra.mxu0 0.0
        %440 = vmatprep.subr.mxu0 0.0
        %441 = vmatpush1.msra.mxu0 0.0
        %442 = vmatprep.subr.mxu0 0.0
        %443 = vmatpush1.msra.mxu0 0.0
        %444 = vmatprep.subr.mxu0 0.0
        %445 = vmatpush1.msra.mxu0 0.0
        %446 = vmatprep.subr.mxu0 0.0
        %447 = vmatpush1.msra.mxu0 0.0
        %448 = vmatprep.subr.mxu0 0.0
        %449 = vmatpush1.msra.mxu0 0.0
        %450 = vmatprep.mubr.f32.mxu0 0.0
        %451 = vmatmul.mubr.f32.gmra.mrb[0].mxu0 %v375
        %v452 = vpop.f32.mrb[0].mxu0
        %v453 = vadd.f32 0.0, %v452
        %v454 = vpop.f32.mrb[0].mxu0
        %455 = vmatprep.mubr.f32.mxu0 0.0
        %456 = vmatmul.mubr.f32.gmra.mrb[0].mxu0 %v378
        %v457 = vpop.f32.mrb[0].mxu0
        %v458 = vadd.f32 0.0, %v457
        %v459 = vpop.f32.mrb[0].mxu0
        %460 = vmatprep.mubr.f32.mxu0 0.0
        %461 = vmatmul.mubr.f32.gmra.mrb[0].mxu0 %v381
        %v462 = vpop.f32.mrb[0].mxu0
        %v463 = vadd.f32 0.0, %v462
        %v464 = vpop.f32.mrb[0].mxu0
        %465 = vmatprep.mubr.f32.mxu0 0.0
        %466 = vmatmul.mubr.f32.gmra.mrb[0].mxu0 %v384
        %v467 = vpop.f32.mrb[0].mxu0
        %v468 = vadd.f32 0.0, %v467
        %v469 = vpop.f32.mrb[0].mxu0
        %470 = vdwg.mxu0
        %v471 = vld [vmem:[#allocation10] sm:$0xff]
        %v472 = vadd.f32 %v453, %v471
        %v473 = vadd.f32 %v458, %v471
        %v474 = vadd.f32 %v463, %v471
        %v475 = vadd.f32 %v468, %v471
        %476 = vst [vmem:[#allocation3] sm:$0xff] %v472
        %477 = vst [vmem:[#allocation3 + $0x8] sm:$0xff] %v473
        %478 = vst [vmem:[#allocation3 + $0x10] sm:$0xff] %v474
        %479 = vst [vmem:[#allocation3 + $0x18] sm:$0xff] %v475
        %v480 = vld [vmem:[#allocation9] sm:$0xff]
        %v481 = vld [vmem:[#allocation9 + $0x8] sm:$0xff]
        %v482 = vld [vmem:[#allocation9 + $0x10] sm:$0xff]
        %v483 = vld [vmem:[#allocation9 + $0x18] sm:$0xff]
        %v484 = vld [vmem:[#allocation9 + $0x20] sm:$0xff]
        %v485 = vld [vmem:[#allocation9 + $0x28] sm:$0xff]
        %v486 = vld [vmem:[#allocation9 + $0x30] sm:$0xff]
        %v487 = vld [vmem:[#allocation9 + $0x38] sm:$0xff]
        %v488 = vld [vmem:[#allocation9 + $0x40] sm:$0xff]
        %v489 = vld [vmem:[#allocation9 + $0x48] sm:$0xff]
        %v490 = vld [vmem:[#allocation9 + $0x50] sm:$0xff]
        %v491 = vld [vmem:[#allocation9 + $0x58] sm:$0xff]
        %v492 = vld [vmem:[#allocation9 + $0x60] sm:$0xff]
        %v493 = vld [vmem:[#allocation9 + $0x68] sm:$0xff]
        %v494 = vld [vmem:[#allocation9 + $0x70] sm:$0xff]
        %v495 = vld [vmem:[#allocation9 + $0x78] sm:$0xff]
        %v496 = vld [vmem:[#allocation2] sm:$0xff]
        %v497 = vld [vmem:[#allocation3] sm:$0xff]
        %498 = vmatprep.subr.mxu0 0.0
        %499 = vmatpush1.msra.mxu0 %v480
        %500 = vmatprep.subr.mxu0 0.0
        %501 = vmatpush1.msra.mxu0 %v481
        %502 = vmatprep.subr.mxu0 0.0
        %503 = vmatpush1.msra.mxu0 %v482
        %504 = vmatprep.subr.mxu0 0.0
        %505 = vmatpush1.msra.mxu0 %v483
        %506 = vmatprep.subr.mxu0 0.0
        %507 = vmatpush1.msra.mxu0 %v484
        %508 = vmatprep.subr.mxu0 0.0
        %509 = vmatpush1.msra.mxu0 %v485
        %510 = vmatprep.subr.mxu0 0.0
        %511 = vmatpush1.msra.mxu0 %v486
        %512 = vmatprep.subr.mxu0 0.0
        %513 = vmatpush1.msra.mxu0 %v487
        %514 = vmatprep.subr.mxu0 0.0
        %515 = vmatpush1.msra.mxu0 %v488
        %516 = vmatprep.subr.mxu0 0.0
        %517 = vmatpush1.msra.mxu0 %v489
        %518 = vmatprep.subr.mxu0 0.0
        %519 = vmatpush1.msra.mxu0 %v490
        %520 = vmatprep.subr.mxu0 0.0
        %521 = vmatpush1.msra.mxu0 %v491
        %522 = vmatprep.subr.mxu0 0.0
        %523 = vmatpush1.msra.mxu0 %v492
        %524 = vmatprep.subr.mxu0 0.0
        %525 = vmatpush1.msra.mxu0 %v493
        %526 = vmatprep.subr.mxu0 0.0
        %527 = vmatpush1.msra.mxu0 %v494
        %528 = vmatprep.subr.mxu0 0.0
        %529 = vmatpush1.msra.mxu0 %v495
        %530 = vmatprep.subr.mxu0 0.0
        %531 = vmatpush1.msra.mxu0 0.0
        %532 = vmatprep.subr.mxu0 0.0
        %533 = vmatpush1.msra.mxu0 0.0
        %534 = vmatprep.subr.mxu0 0.0
        %535 = vmatpush1.msra.mxu0 0.0
        %536 = vmatprep.subr.mxu0 0.0
        %537 = vmatpush1.msra.mxu0 0.0
        %538 = vmatprep.subr.mxu0 0.0
        %539 = vmatpush1.msra.mxu0 0.0
        %540 = vmatprep.subr.mxu0 0.0
        %541 = vmatpush1.msra.mxu0 0.0
        %542 = vmatprep.subr.mxu0 0.0
        %543 = vmatpush1.msra.mxu0 0.0
        %544 = vmatprep.subr.mxu0 0.0
        %545 = vmatpush1.msra.mxu0 0.0
        %546 = vmatprep.subr.mxu0 0.0
        %547 = vmatpush1.msra.mxu0 0.0
        %548 = vmatprep.subr.mxu0 0.0
        %549 = vmatpush1.msra.mxu0 0.0
        %550 = vmatprep.subr.mxu0 0.0
        %551 = vmatpush1.msra.mxu0 0.0
        %552 = vmatprep.subr.mxu0 0.0
        %553 = vmatpush1.msra.mxu0 0.0
        %554 = vmatprep.subr.mxu0 0.0
        %555 = vmatpush1.msra.mxu0 0.0
        %556 = vmatprep.subr.mxu0 0.0
        %557 = vmatpush1.msra.mxu0 0.0
        %558 = vmatprep.subr.mxu0 0.0
        %559 = vmatpush1.msra.mxu0 0.0
        %560 = vmatprep.subr.mxu0 0.0
        %561 = vmatpush1.msra.mxu0 0.0
        %562 = vmatprep.mubr.f32.mxu0 0.0
        %563 = vmatmul.mubr.f32.gmra.mrb[0].mxu0 %v496
        %v564 = vpop.f32.mrb[0].mxu0
        %v565 = vadd.f32 0.0, %v564
        %v566 = vpop.f32.mrb[0].mxu0
        %567 = vdwg.mxu0
        %v568 = vadd.f32 %v497, %v565
        %v569 = vtanh.pop %v568
        %570 = vst [vmem:[%s356] sm:$0xff] %v569
        %s571 = scalar_lea.vmem [#allocation3], 8
        %v572 = vld [vmem:[%s571] sm:$0xff]
        %573 = vmatprep.subr.mxu0 0.0
        %574 = vmatpush1.msra.mxu0 %v480
        %575 = vmatprep.subr.mxu0 0.0
        %576 = vmatpush1.msra.mxu0 %v481
        %577 = vmatprep.subr.mxu0 0.0
        %578 = vmatpush1.msra.mxu0 %v482
        %579 = vmatprep.subr.mxu0 0.0
        %580 = vmatpush1.msra.mxu0 %v483
        %581 = vmatprep.subr.mxu0 0.0
        %582 = vmatpush1.msra.mxu0 %v484
        %583 = vmatprep.subr.mxu0 0.0
        %584 = vmatpush1.msra.mxu0 %v485
        %585 = vmatprep.subr.mxu0 0.0
        %586 = vmatpush1.msra.mxu0 %v486
        %587 = vmatprep.subr.mxu0 0.0
        %588 = vmatpush1.msra.mxu0 %v487
        %589 = vmatprep.subr.mxu0 0.0
        %590 = vmatpush1.msra.mxu0 %v488
        %591 = vmatprep.subr.mxu0 0.0
        %592 = vmatpush1.msra.mxu0 %v489
        %593 = vmatprep.subr.mxu0 0.0
        %594 = vmatpush1.msra.mxu0 %v490
        %595 = vmatprep.subr.mxu0 0.0
        %596 = vmatpush1.msra.mxu0 %v491
        %597 = vmatprep.subr.mxu0 0.0
        %598 = vmatpush1.msra.mxu0 %v492
        %599 = vmatprep.subr.mxu0 0.0
        %600 = vmatpush1.msra.mxu0 %v493
        %601 = vmatprep.subr.mxu0 0.0
        %602 = vmatpush1.msra.mxu0 %v494
        %603 = vmatprep.subr.mxu0 0.0
        %604 = vmatpush1.msra.mxu0 %v495
        %605 = vmatprep.subr.mxu0 0.0
        %606 = vmatpush1.msra.mxu0 0.0
        %607 = vmatprep.subr.mxu0 0.0
        %608 = vmatpush1.msra.mxu0 0.0
        %609 = vmatprep.subr.mxu0 0.0
        %610 = vmatpush1.msra.mxu0 0.0
        %611 = vmatprep.subr.mxu0 0.0
        %612 = vmatpush1.msra.mxu0 0.0
        %613 = vmatprep.subr.mxu0 0.0
        %614 = vmatpush1.msra.mxu0 0.0
        %615 = vmatprep.subr.mxu0 0.0
        %616 = vmatpush1.msra.mxu0 0.0
        %617 = vmatprep.subr.mxu0 0.0
        %618 = vmatpush1.msra.mxu0 0.0
        %619 = vmatprep.subr.mxu0 0.0
        %620 = vmatpush1.msra.mxu0 0.0
        %621 = vmatprep.subr.mxu0 0.0
        %622 = vmatpush1.msra.mxu0 0.0
        %623 = vmatprep.subr.mxu0 0.0
        %624 = vmatpush1.msra.mxu0 0.0
        %625 = vmatprep.subr.mxu0 0.0
        %626 = vmatpush1.msra.mxu0 0.0
        %627 = vmatprep.subr.mxu0 0.0
        %628 = vmatpush1.msra.mxu0 0.0
        %629 = vmatprep.subr.mxu0 0.0
        %630 = vmatpush1.msra.mxu0 0.0
        %631 = vmatprep.subr.mxu0 0.0
        %632 = vmatpush1.msra.mxu0 0.0
        %633 = vmatprep.subr.mxu0 0.0
        %634 = vmatpush1.msra.mxu0 0.0
        %635 = vmatprep.subr.mxu0 0.0
        %636 = vmatpush1.msra.mxu0 0.0
        %637 = vmatprep.mubr.f32.mxu0 0.0
        %638 = vmatmul.mubr.f32.gmra.mrb[0].mxu0 %v569
        %v639 = vpop.f32.mrb[0].mxu0
        %v640 = vadd.f32 0.0, %v639
        %v641 = vpop.f32.mrb[0].mxu0
        %642 = vdwg.mxu0
        %v643 = vadd.f32 %v572, %v640
        %v644 = vtanh.pop %v643
        %s645 = scalar_lea.vmem %s356, 8 [#allocation13]
        %646 = vst [vmem:[%s645] sm:$0xff] %v644
        %s647 = scalar_lea.vmem [#allocation3], 16
        %v648 = vld [vmem:[%s647] sm:$0xff]
        %649 = vmatprep.subr.mxu0 0.0
        %650 = vmatpush1.msra.mxu0 %v480
        %651 = vmatprep.subr.mxu0 0.0
        %652 = vmatpush1.msra.mxu0 %v481
        %653 = vmatprep.subr.mxu0 0.0
        %654 = vmatpush1.msra.mxu0 %v482
        %655 = vmatprep.subr.mxu0 0.0
        %656 = vmatpush1.msra.mxu0 %v483
        %657 = vmatprep.subr.mxu0 0.0
        %658 = vmatpush1.msra.mxu0 %v484
        %659 = vmatprep.subr.mxu0 0.0
        %660 = vmatpush1.msra.mxu0 %v485
        %661 = vmatprep.subr.mxu0 0.0
        %662 = vmatpush1.msra.mxu0 %v486
        %663 = vmatprep.subr.mxu0 0.0
        %664 = vmatpush1.msra.mxu0 %v487
        %665 = vmatprep.subr.mxu0 0.0
        %666 = vmatpush1.msra.mxu0 %v488
        %667 = vmatprep.subr.mxu0 0.0
        %668 = vmatpush1.msra.mxu0 %v489
        %669 = vmatprep.subr.mxu0 0.0
        %670 = vmatpush1.msra.mxu0 %v490
        %671 = vmatprep.subr.mxu0 0.0
        %672 = vmatpush1.msra.mxu0 %v491
        %673 = vmatprep.subr.mxu0 0.0
        %674 = vmatpush1.msra.mxu0 %v492
        %675 = vmatprep.subr.mxu0 0.0
        %676 = vmatpush1.msra.mxu0 %v493
        %677 = vmatprep.subr.mxu0 0.0
        %678 = vmatpush1.msra.mxu0 %v494
        %679 = vmatprep.subr.mxu0 0.0
        %680 = vmatpush1.msra.mxu0 %v495
        %681 = vmatprep.subr.mxu0 0.0
        %682 = vmatpush1.msra.mxu0 0.0
        %683 = vmatprep.subr.mxu0 0.0
        %684 = vmatpush1.msra.mxu0 0.0
        %685 = vmatprep.subr.mxu0 0.0
        %686 = vmatpush1.msra.mxu0 0.0
        %687 = vmatprep.subr.mxu0 0.0
        %688 = vmatpush1.msra.mxu0 0.0
        %689 = vmatprep.subr.mxu0 0.0
        %690 = vmatpush1.msra.mxu0 0.0
        %691 = vmatprep.subr.mxu0 0.0
        %692 = vmatpush1.msra.mxu0 0.0
        %693 = vmatprep.subr.mxu0 0.0
        %694 = vmatpush1.msra.mxu0 0.0
        %695 = vmatprep.subr.mxu0 0.0
        %696 = vmatpush1.msra.mxu0 0.0
        %697 = vmatprep.subr.mxu0 0.0
        %698 = vmatpush1.msra.mxu0 0.0
        %699 = vmatprep.subr.mxu0 0.0
        %700 = vmatpush1.msra.mxu0 0.0
        %701 = vmatprep.subr.mxu0 0.0
        %702 = vmatpush1.msra.mxu0 0.0
        %703 = vmatprep.subr.mxu0 0.0
        %704 = vmatpush1.msra.mxu0 0.0
        %705 = vmatprep.subr.mxu0 0.0
        %706 = vmatpush1.msra.mxu0 0.0
        %707 = vmatprep.subr.mxu0 0.0
        %708 = vmatpush1.msra.mxu0 0.0
        %709 = vmatprep.subr.mxu0 0.0
        %710 = vmatpush1.msra.mxu0 0.0
        %711 = vmatprep.subr.mxu0 0.0
        %712 = vmatpush1.msra.mxu0 0.0
        %713 = vmatprep.mubr.f32.mxu0 0.0
        %714 = vmatmul.mubr.f32.gmra.mrb[0].mxu0 %v644
        %v715 = vpop.f32.mrb[0].mxu0
        %v716 = vadd.f32 0.0, %v715
        %v717 = vpop.f32.mrb[0].mxu0
        %718 = vdwg.mxu0
        %v719 = vadd.f32 %v648, %v716
        %v720 = vtanh.pop %v719
        %s721 = scalar_lea.vmem %s356, 16 [#allocation13]
        %722 = vst [vmem:[%s721] sm:$0xff] %v720
        %s723 = scalar_lea.vmem [#allocation3], 24
        %v724 = vld [vmem:[%s723] sm:$0xff]
        %725 = vmatprep.subr.mxu0 0.0
        %726 = vmatpush1.msra.mxu0 %v480
        %727 = vmatprep.subr.mxu0 0.0
        %728 = vmatpush1.msra.mxu0 %v481
        %729 = vmatprep.subr.mxu0 0.0
        %730 = vmatpush1.msra.mxu0 %v482
        %731 = vmatprep.subr.mxu0 0.0
        %732 = vmatpush1.msra.mxu0 %v483
        %733 = vmatprep.subr.mxu0 0.0
        %734 = vmatpush1.msra.mxu0 %v484
        %735 = vmatprep.subr.mxu0 0.0
        %736 = vmatpush1.msra.mxu0 %v485
        %737 = vmatprep.subr.mxu0 0.0
        %738 = vmatpush1.msra.mxu0 %v486
        %739 = vmatprep.subr.mxu0 0.0
        %740 = vmatpush1.msra.mxu0 %v487
        %741 = vmatprep.subr.mxu0 0.0
        %742 = vmatpush1.msra.mxu0 %v488
        %743 = vmatprep.subr.mxu0 0.0
        %744 = vmatpush1.msra.mxu0 %v489
        %745 = vmatprep.subr.mxu0 0.0
        %746 = vmatpush1.msra.mxu0 %v490
        %747 = vmatprep.subr.mxu0 0.0
        %748 = vmatpush1.msra.mxu0 %v491
        %749 = vmatprep.subr.mxu0 0.0
        %750 = vmatpush1.msra.mxu0 %v492
        %751 = vmatprep.subr.mxu0 0.0
        %752 = vmatpush1.msra.mxu0 %v493
        %753 = vmatprep.subr.mxu0 0.0
        %754 = vmatpush1.msra.mxu0 %v494
        %755 = vmatprep.subr.mxu0 0.0
        %756 = vmatpush1.msra.mxu0 %v495
        %757 = vmatprep.subr.mxu0 0.0
        %758 = vmatpush1.msra.mxu0 0.0
        %759 = vmatprep.subr.mxu0 0.0
        %760 = vmatpush1.msra.mxu0 0.0
        %761 = vmatprep.subr.mxu0 0.0
        %762 = vmatpush1.msra.mxu0 0.0
        %763 = vmatprep.subr.mxu0 0.0
        %764 = vmatpush1.msra.mxu0 0.0
        %765 = vmatprep.subr.mxu0 0.0
        %766 = vmatpush1.msra.mxu0 0.0
        %767 = vmatprep.subr.mxu0 0.0
        %768 = vmatpush1.msra.mxu0 0.0
        %769 = vmatprep.subr.mxu0 0.0
        %770 = vmatpush1.msra.mxu0 0.0
        %771 = vmatprep.subr.mxu0 0.0
        %772 = vmatpush1.msra.mxu0 0.0
        %773 = vmatprep.subr.mxu0 0.0
        %774 = vmatpush1.msra.mxu0 0.0
        %775 = vmatprep.subr.mxu0 0.0
        %776 = vmatpush1.msra.mxu0 0.0
        %777 = vmatprep.subr.mxu0 0.0
        %778 = vmatpush1.msra.mxu0 0.0
        %779 = vmatprep.subr.mxu0 0.0
        %780 = vmatpush1.msra.mxu0 0.0
        %781 = vmatprep.subr.mxu0 0.0
        %782 = vmatpush1.msra.mxu0 0.0
        %783 = vmatprep.subr.mxu0 0.0
        %784 = vmatpush1.msra.mxu0 0.0
        %785 = vmatprep.subr.mxu0 0.0
        %786 = vmatpush1.msra.mxu0 0.0
        %787 = vmatprep.subr.mxu0 0.0
        %788 = vmatpush1.msra.mxu0 0.0
        %789 = vmatprep.mubr.f32.mxu0 0.0
        %790 = vmatmul.mubr.f32.gmra.mrb[0].mxu0 %v720
        %v791 = vpop.f32.mrb[0].mxu0
        %v792 = vadd.f32 0.0, %v791
        %v793 = vpop.f32.mrb[0].mxu0
        %794 = vdwg.mxu0
        %v795 = vadd.f32 %v724, %v792
        %v796 = vtanh.pop %v795
        %s797 = scalar_lea.vmem %s356, 24 [#allocation13]
        %798 = vst [vmem:[%s797] sm:$0xff] %v796
        %799 = vst [vmem:[#allocation2] sm:$0xff] %v796
        %p800 = scmp.eq.s32.totalorder %s32, 1
        // Predicated region
        $region65: #{gamma_net_forward.1} parent=39 // pred_check
          %p801 = pneg %p800
        $region66: #{gamma_net_forward.1} parent=39 // pred_check_branch
          %803 = sbr.rel (%p801) target = $region68
        $region67: #{gamma_net_forward.1} parent=39 // pred_region
          %804 = vst [vmem:[#allocation14] sm:$0xff] %v796
        $region68: #{gamma_net_forward.1} parent=39 // pred_fallthru
          _
        %s805 = sand.u32 %s171, 1
        %s806 = scalar_lea.sflag [#allocation6], %s805
        %s807 = sand.u32 %s171, 1
        %s808 = smul.addr %s807, 32
        %s809 = scalar_lea.vmem [#allocation13], %s808
        // Predicated region
        $region69: #{gamma_net_forward.1} parent=39 // pred_check
          %p810 = pneg %p181
        $region70: #{gamma_net_forward.1} parent=39 // pred_check_branch
          %812 = sbr.rel (%p810) target = $region72
        $region71: #{gamma_net_forward.1} parent=39 // pred_region
          %s813 = smul.u32 4, %s32
          %s815 = ssub.s32 512, 512
          %816 = vsyncadd %s806, %s815
          %s817 = sadd.s32 %s31, %s813
          %s818 = smul.addr %s817, 128
          %s819 = scalar_lea.hbm %s5, %s818
          %s820 = sshll.u32 %s809, 4
          %s821 = int_to_ptr.vmem [resolvable:$true] %s820
          %826 = dma.vmem_to_hbm [thread:$0]  %s821, 512, %s819, %s806, 128, 128, 8
        $region72: #{gamma_net_forward.1} parent=39 // pred_fallthru
          _
        // Predicated region
        $region73: #{gamma_net_forward.1} parent=39 // pred_check
          %p827 = pneg %p207
        $region74: #{gamma_net_forward.1} parent=39 // pred_check_branch
          %829 = sbr.rel (%p827) target = $region76
        $region75: #{gamma_net_forward.1} parent=39 // pred_region
          %s831 = ssub.s32 128, 128
          %832 = vsyncadd [#allocation15], %s831
          %s833 = smul.addr %s31, 128
          %s834 = scalar_lea.hbm %s6, %s833
          %s836 = sshll.u32 [#allocation14], 4
          %s837 = int_to_ptr.vmem [resolvable:$true] %s836
          %839 = dma.vmem_to_hbm [thread:$0]  %s837, 128, %s834, [#allocation15]
        $region76: #{gamma_net_forward.1} parent=39 // pred_fallthru
          _
        // Predicated region
        $region77: #{gamma_net_forward.1} parent=39 // pred_check
          %p840 = pneg %p207
        $region78: #{gamma_net_forward.1} parent=39 // pred_check_branch
          %842 = sbr.rel (%p840) target = $region80
        $region79: #{gamma_net_forward.1} parent=39 // pred_region
          %843 = dma.done [#allocation15], 128
        $region80: #{gamma_net_forward.1} parent=39 // pred_fallthru
          _
      $region40: #{gamma_net_forward.1} parent=5 // pred_fallthru
        _
      %p844 = scmp.le.s32.totalorder 2, %s22
      // Predicated region
      $region81: #{gamma_net_forward.1} parent=5 // pred_check
        %p845 = pneg %p844
      $region82: #{gamma_net_forward.1} parent=5 // pred_check_branch
        %847 = sbr.rel (%p845) target = $region84
      $region83: #{gamma_net_forward.1} parent=5 // pred_region
        %s848 = ssub.s32 %s22, 2
        // Predicated region
        $region85: #{gamma_net_forward.1} parent=83 // pred_check
          %p849 = pneg %p187
        $region86: #{gamma_net_forward.1} parent=83 // pred_check_branch
          %851 = sbr.rel (%p849) target = $region88
        $region87: #{gamma_net_forward.1} parent=83 // pred_region
          %s852 = sand.u32 %s172, 1
          %s853 = scalar_lea.sflag [#allocation6], %s852
          %s854 = sand.u32 %s172, 1
          %s855 = smul.addr %s854, 32
          %s856 = scalar_lea.vmem [#allocation13], %s855
          %857 = dma.done %s853, 512
        $region88: #{gamma_net_forward.1} parent=83 // pred_fallthru
          _
      $region84: #{gamma_net_forward.1} parent=5 // pred_fallthru
        _
    $region6: #{gamma_net_forward.1} parent=1 // loop_footer
      %s26 = sadd.s32 1, %s22
    $region7: #{gamma_net_forward.1} parent=1 // loop_footer_branch
      %21 = sbr.rel target = $region3
    $region8: #{gamma_net_forward.1} parent=1 // loop_exit
      _
    %858 = vsyncpa [#allocation5], 1
    %s859 = scalar_lea.sflag [#allocation5], 1
    %860 = vsyncpa %s859, 1
    %861 = vsyncpa [#allocation8], 1
    %862 = vsyncpa [#allocation11], 1
    %863 = vsyncpa [#allocation6], 1
    %s864 = scalar_lea.sflag [#allocation6], 1
    %865 = vsyncpa %s864, 1
    %866 = vsyncpa [#allocation15], 1

</llo_original>
